<compile_context>
chip_gen: v7x
topology: tpu7x:2x2x1
jax: 0.10.0
libtpu: 0.0.40
codegen_flags: <defaults>
</compile_context>

<pallas_src>
import jax
import jax.numpy as jnp
from jax.experimental import pallas as pl
from jax.experimental.pallas import tpu as pltpu


def basicnet_kernel(x_ref, w1_ref, b1_ref, w2_ref, b2_ref, o_ref):
    # One batch tile per grid step: (bt, 784) -> (bt, 10), fully VMEM-resident.
    # Weights arrive pre-cast (w1 matches x dtype; b1/w2/b2 are f32): no per-step casts.
    x = x_ref[...]

    # Layer 1 + ReLU. f32 accumulation on the MXU regardless of input dtype;
    # bias add / ReLU / softmax stay f32 (v5e VPU/EUP have no bf16 path).
    h = jnp.dot(x, w1_ref[...], preferred_element_type=jnp.float32) + b1_ref[...]
    h = jnp.maximum(h, 0.0)

    # Layer 2 (K=5: negligible work).
    logits = jnp.dot(h, w2_ref[...], preferred_element_type=jnp.float32) + b2_ref[...]

    # Numerically stable log_softmax over dim=1 (last axis, strictly row-wise).
    m = jnp.max(logits, axis=-1, keepdims=True)
    shifted = logits - m
    lse = jnp.log(jnp.sum(jnp.exp(shifted), axis=-1, keepdims=True))
    o_ref[...] = (shifted - lse).astype(o_ref.dtype)


def _round_up(x, m):
    return ((x + m - 1) // m) * m


def basicnet_forward(x, w1, b1, w2, b2, *, block_batch=None):
    """x: (B, in_f). w1: (in_f, H), b1: (1, H), w2: (H, O), b2: (1, O)."""
    B, in_f = x.shape
    H = w1.shape[1]
    O = w2.shape[1]

    # Pre-cast weights once outside the kernel. On the bf16 activation path this
    # halves w1's DMA/VMEM bytes and keeps the first matmul a single-pass bf16 MXU op.
    w1 = w1.astype(x.dtype)
    b1 = b1.astype(jnp.float32)
    w2 = w2.astype(jnp.float32)
    b2 = b2.astype(jnp.float32)

    # Generation-aware VMEM budget: 128 MiB on v5e/v6e, 64 MiB per TensorCore on v7x.
    try:
        vmem_cap = int(pltpu.get_tpu_info().vmem_capacity_bytes)
    except Exception:  # conservative fallback (matches smallest generation, v7x)
        vmem_cap = 64 << 20
    vmem_limit = int(vmem_cap * 3 // 4)  # headroom for compiler scratch / output buffers

    itemsize = jnp.dtype(x.dtype).itemsize
    if block_batch is None:
        # Largest tile whose 2-deep-buffered x stream stays within ~1/3 of scoped VMEM;
        # cap at 4096 f32 rows (8192 bf16) so single DMAs stay sane on 128 MiB parts.
        bt_budget = (vmem_limit // 3) // (2 * in_f * itemsize)
        block_batch = min((bt_budget // 8) * 8, 16384 // itemsize)
    block_batch = max(8, (block_batch // 8) * 8)  # sublane-aligned

    # Tile choice. Never pad x in HBM (that would re-stream the dominant bytes); the
    # partial tail block is masked by Pallas on writeback.
    if B < 16:
        bt = B                                   # single tile; block dim == full array dim
    else:
        # >= 2 tiles so the "parallel" batch axis can shard across v7x's 2 TensorCores.
        bt = min(block_batch, _round_up(-(-B // 2), 8))
    num_tiles = pl.cdiv(B, bt)

    weights_bytes = sum(int(a.size) * a.dtype.itemsize for a in (w1, b1, w2, b2))
    cost = pl.CostEstimate(
        flops=2 * B * in_f * H + 2 * B * H * O,
        transcendentals=B * (O + 1),             # exp per logit + log per row
        bytes_accessed=B * in_f * itemsize + B * O * 4 + weights_bytes,
    )

    return pl.pallas_call(
        basicnet_kernel,
        out_shape=jax.ShapeDtypeStruct((B, O), jnp.float32),
        grid=(num_tiles,),
        in_specs=[
            pl.BlockSpec((bt, in_f), lambda i: (i, 0)),   # x streams per batch tile
            pl.BlockSpec((in_f, H), lambda i: (0, 0)),    # weights stay VMEM-resident
            pl.BlockSpec((1, H), lambda i: (0, 0)),
            pl.BlockSpec((H, O), lambda i: (0, 0)),
            pl.BlockSpec((1, O), lambda i: (0, 0)),
        ],
        out_specs=pl.BlockSpec((bt, O), lambda i: (i, 0)),
        compiler_params=pltpu.CompilerParams(
            dimension_semantics=("parallel",),            # megacore-shardable batch axis
            vmem_limit_bytes=vmem_limit,
        ),
        cost_estimate=cost,
    )(x, w1, b1, w2, b2)


def init_params(key, input_size=784, hidden=5, output_size=10):
    # Deterministic init mirroring nn.Linear's U(-1/sqrt(fan_in), +1/sqrt(fan_in)).
    k1, k2, k3, k4 = jax.random.split(key, 4)
    bound1 = 1.0 / jnp.sqrt(jnp.float32(input_size))
    bound2 = 1.0 / jnp.sqrt(jnp.float32(hidden))
    w1 = jax.random.uniform(k1, (input_size, hidden), jnp.float32, -bound1, bound1)
    b1 = jax.random.uniform(k2, (1, hidden), jnp.float32, -bound1, bound1)
    w2 = jax.random.uniform(k3, (hidden, output_size), jnp.float32, -bound2, bound2)
    b2 = jax.random.uniform(k4, (1, output_size), jnp.float32, -bound2, bound2)
    return w1, b1, w2, b2


if __name__ == "__main__":
    key = jax.random.PRNGKey(0)
    kx, kp = jax.random.split(key)

    batch, input_size, hidden, output_size = 20, 784, 5, 10
    x = jax.random.normal(kx, (batch, input_size), jnp.float32)
    w1, b1, w2, b2 = init_params(kp, input_size, hidden, output_size)

    # Reference in plain JAX (same math as the PyTorch module).
    h_ref = jnp.maximum(x @ w1 + b1, 0.0)
    ref = jax.nn.log_softmax(h_ref @ w2 + b2, axis=1)

    # 1) Auto tiling: >=2 tiles with a masked partial tail (20 -> tiles of 16 + 4), no padding.
    out = jax.block_until_ready(basicnet_forward(x, w1, b1, w2, b2))
    assert out.shape == (batch, output_size)
    assert jnp.allclose(out, ref, atol=1e-5, rtol=1e-5)

    # 2) Forced small tiles: 3 pipelined grid steps of 8 (last one partial/masked).
    out_tiled = jax.block_until_ready(basicnet_forward(x, w1, b1, w2, b2, block_batch=8))
    assert out_tiled.shape == (batch, output_size)
    assert jnp.allclose(out_tiled, ref, atol=1e-5, rtol=1e-5)

    # 3) bf16 activation/weight stream (halves HBM bytes; f32 accumulation in-kernel).
    out_bf16 = jax.block_until_ready(
        basicnet_forward(x.astype(jnp.bfloat16), w1, b1, w2, b2))
    assert out_bf16.shape == (batch, output_size)
    assert bool(jnp.all(jnp.isfinite(out_bf16)))
    assert jnp.allclose(out_bf16, ref, atol=5e-2)

    # 4) Tiny-batch single-tile path (block dim == full array dim, B not a multiple of 8).
    out_small = jax.block_until_ready(basicnet_forward(x[:6], w1, b1, w2, b2))
    assert out_small.shape == (6, output_size)
    assert jnp.allclose(out_small, ref[:6], atol=1e-5, rtol=1e-5)

    print("KERNEL_OK")
</pallas_src>

<mosaic_0001>
module attributes {stable_mosaic.version = 11 : i64} {
  func.func @basicnet_kernel(%arg0: i32, %arg1: memref<16x784xf32, #tpu.memory_space<vmem>>, %arg2: memref<784x5xf32, #tpu.memory_space<vmem>>, %arg3: memref<1x5xf32, #tpu.memory_space<vmem>>, %arg4: memref<5x10xf32, #tpu.memory_space<vmem>>, %arg5: memref<1x10xf32, #tpu.memory_space<vmem>>, %arg6: memref<16x10xf32, #tpu.memory_space<vmem>>) attributes {dimension_semantics = [#tpu.dimension_semantics<parallel>], iteration_bounds = array<i64: 2>, scalar_prefetch = 0 : i64, scratch_operands = 0 : i64, tpu.core_type = #tpu.core_type<tc>, window_params = [{transform_indices = @transform_0, window_bounds = array<i64: 16, 784>}, {pipeline_mode = #tpu.pipeline_mode<synchronous>, transform_indices = @transform_1, window_bounds = array<i64: 784, 5>}, {pipeline_mode = #tpu.pipeline_mode<synchronous>, transform_indices = @transform_2, window_bounds = array<i64: 1, 5>}, {pipeline_mode = #tpu.pipeline_mode<synchronous>, transform_indices = @transform_3, window_bounds = array<i64: 5, 10>}, {pipeline_mode = #tpu.pipeline_mode<synchronous>, transform_indices = @transform_4, window_bounds = array<i64: 1, 10>}, {transform_indices = @transform_5, window_bounds = array<i64: 16, 10>}]} {
    %c0 = arith.constant 0 : index
    %c0_0 = arith.constant 0 : index
    %0 = vector.load %arg1[%c0, %c0_0] : memref<16x784xf32, #tpu.memory_space<vmem>>, vector<16x784xf32>
    %c0_1 = arith.constant 0 : index
    %c0_2 = arith.constant 0 : index
    %1 = vector.load %arg2[%c0_1, %c0_2] : memref<784x5xf32, #tpu.memory_space<vmem>>, vector<784x5xf32>
    %cst = arith.constant dense<0.000000e+00> : vector<16x5xf32>
    %2 = tpu.matmul %0, %1, %cst {dimension_numbers = #tpu.dot_dimension_numbers<[1], [0], [0], [1], [0, 0, 1, 1], [], []>} : vector<16x784xf32>, vector<784x5xf32>, vector<16x5xf32> -> vector<16x5xf32>
    %c0_3 = arith.constant 0 : index
    %c0_4 = arith.constant 0 : index
    %3 = vector.load %arg3[%c0_3, %c0_4] : memref<1x5xf32, #tpu.memory_space<vmem>>, vector<1x5xf32>
    %4 = vector.broadcast %3 : vector<1x5xf32> to vector<16x5xf32>
    %5 = arith.addf %2, %4 : vector<16x5xf32>
    %cst_5 = arith.constant 0.000000e+00 : f32
    %6 = vector.broadcast %cst_5 : f32 to vector<16x5xf32>
    %7 = arith.maximumf %5, %6 : vector<16x5xf32>
    %c0_6 = arith.constant 0 : index
    %c0_7 = arith.constant 0 : index
    %8 = vector.load %arg4[%c0_6, %c0_7] : memref<5x10xf32, #tpu.memory_space<vmem>>, vector<5x10xf32>
    %cst_8 = arith.constant dense<0.000000e+00> : vector<16x10xf32>
    %9 = tpu.matmul %7, %8, %cst_8 {dimension_numbers = #tpu.dot_dimension_numbers<[1], [0], [0], [1], [0, 0, 1, 1], [], []>} : vector<16x5xf32>, vector<5x10xf32>, vector<16x10xf32> -> vector<16x10xf32>
    %c0_9 = arith.constant 0 : index
    %c0_10 = arith.constant 0 : index
    %10 = vector.load %arg5[%c0_9, %c0_10] : memref<1x10xf32, #tpu.memory_space<vmem>>, vector<1x10xf32>
    %11 = vector.broadcast %10 : vector<1x10xf32> to vector<16x10xf32>
    %12 = arith.addf %9, %11 : vector<16x10xf32>
    %cst_11 = arith.constant dense<0xFF800000> : vector<16xf32>
    %13 = vector.multi_reduction <maximumf>, %12, %cst_11 [1] : vector<16x10xf32> to vector<16xf32>
    %14 = vector.shape_cast %13 : vector<16xf32> to vector<16x1xf32>
    %15 = vector.broadcast %14 : vector<16x1xf32> to vector<16x10xf32>
    %16 = arith.subf %12, %15 : vector<16x10xf32>
    %17 = math.exp %16 : vector<16x10xf32>
    %cst_12 = arith.constant dense<0.000000e+00> : vector<16xf32>
    %18 = vector.multi_reduction <add>, %17, %cst_12 [1] : vector<16x10xf32> to vector<16xf32>
    %19 = vector.shape_cast %18 : vector<16xf32> to vector<16x1xf32>
    %20 = math.log %19 : vector<16x1xf32>
    %21 = vector.broadcast %20 : vector<16x1xf32> to vector<16x10xf32>
    %22 = arith.subf %16, %21 : vector<16x10xf32>
    %c0_13 = arith.constant 0 : index
    %c0_14 = arith.constant 0 : index
    %23 = vector.load %arg6[%c0_13, %c0_14] : memref<16x10xf32, #tpu.memory_space<vmem>>, vector<16x10xf32>
    tpu.vector_store %arg6[%c0_13, %c0_14], %22 {strides = array<i32>} : memref<16x10xf32, #tpu.memory_space<vmem>>, vector<16x10xf32>,
    return
  }
  func.func @transform_0(%arg0: i32) -> (i32, i32) {
    %c0_i32 = arith.constant 0 : i32
    %c0_i32_0 = arith.constant 0 : i32
    return %arg0, %c0_i32 : i32, i32
  }
  func.func @transform_1(%arg0: i32) -> (i32, i32) {
    %c0_i32 = arith.constant 0 : i32
    %c0_i32_0 = arith.constant 0 : i32
    %c0_i32_1 = arith.constant 0 : i32
    return %c0_i32, %c0_i32_0 : i32, i32
  }
  func.func @transform_2(%arg0: i32) -> (i32, i32) {
    %c0_i32 = arith.constant 0 : i32
    %c0_i32_0 = arith.constant 0 : i32
    %c0_i32_1 = arith.constant 0 : i32
    return %c0_i32, %c0_i32_0 : i32, i32
  }
  func.func @transform_3(%arg0: i32) -> (i32, i32) {
    %c0_i32 = arith.constant 0 : i32
    %c0_i32_0 = arith.constant 0 : i32
    %c0_i32_1 = arith.constant 0 : i32
    return %c0_i32, %c0_i32_0 : i32, i32
  }
  func.func @transform_4(%arg0: i32) -> (i32, i32) {
    %c0_i32 = arith.constant 0 : i32
    %c0_i32_0 = arith.constant 0 : i32
    %c0_i32_1 = arith.constant 0 : i32
    return %c0_i32, %c0_i32_0 : i32, i32
  }
  func.func @transform_5(%arg0: i32) -> (i32, i32) {
    %c0_i32 = arith.constant 0 : i32
    %c0_i32_0 = arith.constant 0 : i32
    return %arg0, %c0_i32 : i32, i32
  }
}

</mosaic_0001>

<llo_original>
// kernel: tpu_custom_call.1
$region0: #{tpu_custom_call.1}
  #allocation0 [shape = 'u32[]', space=smem, size = 0x4, offset = 0x4, fixed_abs, tag = 'smem constant byte address 0x4 - core index']
  #allocation1 [shape = 'u32[144,128]{1,0:T(1,128)}', space=vmem, size = 0x12000, scoped, tag = 'internal scratch']
  %s0 = inlined_call_operand.vmem [shape: f32[20,784], index: 0, kind: input, shape index: {}]
  %s1 = inlined_call_operand.vmem [shape: f32[784,5], index: 1, kind: input, shape index: {}]
  %s2 = inlined_call_operand.vmem [shape: f32[1,5], index: 2, kind: input, shape index: {}]
  %s3 = inlined_call_operand.vmem [shape: f32[5,10], index: 3, kind: input, shape index: {}]
  %s4 = inlined_call_operand.vmem [shape: f32[1,10], index: 4, kind: input, shape index: {}]
  %s5 = inlined_call_operand.vmem [shape: f32[20,10], index: 5, kind: output, shape index: {}]
  %s6 = sld [smem:[#allocation0]]
  $region101: #{tpu_custom_call.1} parent=0
    _
  %s8 = ssub.s32 1, %s6
  %s9 = scalar_select 0, %s8, %s6
  $region1: #{tpu_custom_call.1} parent=0
    #allocation2 [shape = 'u8[16384]{0}', space=vmem, size = 0x4000, scoped, tag = 'output window, operand 0']
    loop: start=0, step=1, limit=4
    $region2: #{tpu_custom_call.1} parent=1 // loop_pre_header
      _
    $region3: #{tpu_custom_call.1} parent=1 // loop_header
      %s11 = sphi 0, %s15
      %p12 = scmp.ge.s32.totalorder %s11, 4
      %s21 = sphi 0, %s23
      %s24 = sphi 0, %s21
      %s25 = sphi 0, %s24
      %s41 = sphi 0, %s25
      %s45 = sphi 0, %s45
      %s47 = sphi 0, %s45
      %s48 = sphi 0, %s47
      %s62 = sphi 0, %s48
      %s66 = sphi 0, %s66
      %s68 = sphi 0, %s66
      %s69 = sphi 0, %s68
      %s83 = sphi 0, %s69
      %s87 = sphi 0, %s87
      %s89 = sphi 0, %s87
      %s90 = sphi 0, %s89
      %s104 = sphi 0, %s90
      %s108 = sphi 0, %s108
      %s110 = sphi 0, %s108
      %s111 = sphi 0, %s110
      %s125 = sphi 0, %s111
      %s131 = sphi 0, %s133
      %s134 = sphi 0, %s131
      %s135 = sphi 0, %s134
      %s151 = sphi 0, %s135
    $region4: #{tpu_custom_call.1} parent=1 // loop_header_branch
      %14 = sbr.rel (%p12) target = $region8
    $region5: #{tpu_custom_call.1} parent=1 // loop_body
      %s16 = ssub.s32 %s11, 1
      %s17 = ssub.s32 %s11, 2
      %s18 = sadd.s32 %s11, 1
      %s19 = ssub.s32 %s11, %s18
      %p20 = scmp.eq.s32.totalorder %s19, 0
      %s22 = sadd.s32 %s21, 1
      %s23 = scalar_select %p20, %s21, %s22
      %p26 = pneg %p20
      %p27 = scmp.eq.s32.totalorder %s11, 1
      %p28 = por %p26, %p27
      %p29 = scmp.ne.s32.totalorder %s21, %s24
      %p30 = scmp.eq.s32.totalorder %s11, 0
      %p31 = por %p29, %p30
      %p32 = scmp.ne.s32.totalorder %s21, %s24
      %p33 = scmp.eq.s32.totalorder %s16, 1
      %p34 = por %p32, %p33
      %p35 = scmp.ne.s32.totalorder %s24, %s25
      %p36 = scmp.eq.s32.totalorder %s16, 0
      %p37 = por %p35, %p36
      %p38 = scmp.ne.s32.totalorder %s24, %s25
      %p39 = scmp.eq.s32.totalorder %s17, 1
      %p40 = por %p38, %p39
      %p42 = scmp.ne.s32.totalorder %s25, %s41
      %p43 = scmp.eq.s32.totalorder %s17, 0
      %p44 = por %p42, %p43
      %s46 = sadd.s32 %s45, 1
      %p49 = scmp.eq.s32.totalorder %s11, 1
      %p50 = scmp.ne.s32.totalorder %s45, %s47
      %p51 = scmp.eq.s32.totalorder %s11, 0
      %p52 = por %p50, %p51
      %p53 = scmp.ne.s32.totalorder %s45, %s47
      %p54 = scmp.eq.s32.totalorder %s16, 1
      %p55 = por %p53, %p54
      %p56 = scmp.ne.s32.totalorder %s47, %s48
      %p57 = scmp.eq.s32.totalorder %s16, 0
      %p58 = por %p56, %p57
      %p59 = scmp.ne.s32.totalorder %s47, %s48
      %p60 = scmp.eq.s32.totalorder %s17, 1
      %p61 = por %p59, %p60
      %p63 = scmp.ne.s32.totalorder %s48, %s62
      %p64 = scmp.eq.s32.totalorder %s17, 0
      %p65 = por %p63, %p64
      %s67 = sadd.s32 %s66, 1
      %p70 = scmp.eq.s32.totalorder %s11, 1
      %p71 = scmp.ne.s32.totalorder %s66, %s68
      %p72 = scmp.eq.s32.totalorder %s11, 0
      %p73 = por %p71, %p72
      %p74 = scmp.ne.s32.totalorder %s66, %s68
      %p75 = scmp.eq.s32.totalorder %s16, 1
      %p76 = por %p74, %p75
      %p77 = scmp.ne.s32.totalorder %s68, %s69
      %p78 = scmp.eq.s32.totalorder %s16, 0
      %p79 = por %p77, %p78
      %p80 = scmp.ne.s32.totalorder %s68, %s69
      %p81 = scmp.eq.s32.totalorder %s17, 1
      %p82 = por %p80, %p81
      %p84 = scmp.ne.s32.totalorder %s69, %s83
      %p85 = scmp.eq.s32.totalorder %s17, 0
      %p86 = por %p84, %p85
      %s88 = sadd.s32 %s87, 1
      %p91 = scmp.eq.s32.totalorder %s11, 1
      %p92 = scmp.ne.s32.totalorder %s87, %s89
      %p93 = scmp.eq.s32.totalorder %s11, 0
      %p94 = por %p92, %p93
      %p95 = scmp.ne.s32.totalorder %s87, %s89
      %p96 = scmp.eq.s32.totalorder %s16, 1
      %p97 = por %p95, %p96
      %p98 = scmp.ne.s32.totalorder %s89, %s90
      %p99 = scmp.eq.s32.totalorder %s16, 0
      %p100 = por %p98, %p99
      %p101 = scmp.ne.s32.totalorder %s89, %s90
      %p102 = scmp.eq.s32.totalorder %s17, 1
      %p103 = por %p101, %p102
      %p105 = scmp.ne.s32.totalorder %s90, %s104
      %p106 = scmp.eq.s32.totalorder %s17, 0
      %p107 = por %p105, %p106
      %s109 = sadd.s32 %s108, 1
      %p112 = scmp.eq.s32.totalorder %s11, 1
      %p113 = scmp.ne.s32.totalorder %s108, %s110
      %p114 = scmp.eq.s32.totalorder %s11, 0
      %p115 = por %p113, %p114
      %p116 = scmp.ne.s32.totalorder %s108, %s110
      %p117 = scmp.eq.s32.totalorder %s16, 1
      %p118 = por %p116, %p117
      %p119 = scmp.ne.s32.totalorder %s110, %s111
      %p120 = scmp.eq.s32.totalorder %s16, 0
      %p121 = por %p119, %p120
      %p122 = scmp.ne.s32.totalorder %s110, %s111
      %p123 = scmp.eq.s32.totalorder %s17, 1
      %p124 = por %p122, %p123
      %p126 = scmp.ne.s32.totalorder %s111, %s125
      %p127 = scmp.eq.s32.totalorder %s17, 0
      %p128 = por %p126, %p127
      %s129 = ssub.s32 %s11, %s18
      %p130 = scmp.eq.s32.totalorder %s129, 0
      %s132 = sadd.s32 %s131, 1
      %s133 = scalar_select %p130, %s131, %s132
      %p136 = pneg %p130
      %p137 = scmp.eq.s32.totalorder %s11, 1
      %p138 = por %p136, %p137
      %p139 = scmp.ne.s32.totalorder %s131, %s134
      %p140 = scmp.eq.s32.totalorder %s11, 0
      %p141 = por %p139, %p140
      %p142 = scmp.ne.s32.totalorder %s131, %s134
      %p143 = scmp.eq.s32.totalorder %s16, 1
      %p144 = por %p142, %p143
      %p145 = scmp.ne.s32.totalorder %s134, %s135
      %p146 = scmp.eq.s32.totalorder %s16, 0
      %p147 = por %p145, %p146
      %p148 = scmp.ne.s32.totalorder %s134, %s135
      %p149 = scmp.eq.s32.totalorder %s17, 1
      %p150 = por %p148, %p149
      %p152 = scmp.ne.s32.totalorder %s135, %s151
      %p153 = scmp.eq.s32.totalorder %s17, 0
      %p154 = por %p152, %p153
      %p155 = scmp.le.s32.totalorder 1, %s11
      %p156 = scmp.lt.s32.totalorder %s11, 3
      %p157 = pnand %p155, %p156
      %p158 = pneg %p157
      // Predicated region
      $region9: #{tpu_custom_call.1} parent=5 // pred_check
        _
      $region10: #{tpu_custom_call.1} parent=5 // pred_check_branch
        %160 = sbr.rel (%p157) target = $region12
      $region11: #{tpu_custom_call.1} parent=5 // pred_region
        %s161 = ssub.s32 %s11, 1
        // Predicated region
        $region13: #{tpu_custom_call.1} parent=11 // pred_check
          %p162 = pneg %p58
        $region14: #{tpu_custom_call.1} parent=11 // pred_check_branch
          %164 = sbr.rel (%p162) target = $region16
        $region15: #{tpu_custom_call.1} parent=11 // pred_region
          _
        $region16: #{tpu_custom_call.1} parent=11 // pred_fallthru
          _
        // Predicated region
        $region17: #{tpu_custom_call.1} parent=11 // pred_check
          %p165 = pneg %p79
        $region18: #{tpu_custom_call.1} parent=11 // pred_check_branch
          %167 = sbr.rel (%p165) target = $region20
        $region19: #{tpu_custom_call.1} parent=11 // pred_region
          _
        $region20: #{tpu_custom_call.1} parent=11 // pred_fallthru
          _
        // Predicated region
        $region21: #{tpu_custom_call.1} parent=11 // pred_check
          %p168 = pneg %p100
        $region22: #{tpu_custom_call.1} parent=11 // pred_check_branch
          %170 = sbr.rel (%p168) target = $region24
        $region23: #{tpu_custom_call.1} parent=11 // pred_region
          _
        $region24: #{tpu_custom_call.1} parent=11 // pred_fallthru
          _
        // Predicated region
        $region25: #{tpu_custom_call.1} parent=11 // pred_check
          %p171 = pneg %p121
        $region26: #{tpu_custom_call.1} parent=11 // pred_check_branch
          %173 = sbr.rel (%p171) target = $region28
        $region27: #{tpu_custom_call.1} parent=11 // pred_region
          _
        $region28: #{tpu_custom_call.1} parent=11 // pred_fallthru
          _
      $region12: #{tpu_custom_call.1} parent=5 // pred_fallthru
        _
      %p174 = scmp.lt.s32.totalorder %s11, 2
      // Predicated region
      $region29: #{tpu_custom_call.1} parent=5 // pred_check
        %p175 = pneg %p174
      $region30: #{tpu_custom_call.1} parent=5 // pred_check_branch
        %177 = sbr.rel (%p175) target = $region32
      $region31: #{tpu_custom_call.1} parent=5 // pred_region
        // Predicated region
        $region33: #{tpu_custom_call.1} parent=31 // pred_check
          %p178 = pneg %p31
        $region34: #{tpu_custom_call.1} parent=31 // pred_check_branch
          %180 = sbr.rel (%p178) target = $region36
        $region35: #{tpu_custom_call.1} parent=31 // pred_region
          %s181 = smul.u32 2, %s11
          %s182 = ssub.s32 3, %s181
          %p183 = scmp.lt.s32.totalorder %s182, 2
          %s184 = scalar_select %p183, %s182, 2
          %s185 = smul.u32 128, %s184
          %s186 = smul.u32 %s185, 7
          %p187 = scmp.lt.s32.totalorder %s181, 2
          %s188 = scalar_select %p187, %s181, 2
          %s189 = smul.addr %s188, 7
          %s190 = smul.addr %s189, 8
          %s191 = scalar_lea.vmem %s0, %s190
          %s192 = smul.u32 2, %s11
          %s193 = ssub.s32 3, %s192
          %p194 = scmp.lt.s32.totalorder %s193, 2
          %s195 = scalar_select %p194, %s193, 2
          %s196 = smul.u32 128, %s195
          %s197 = smul.u32 %s196, 7
        $region36: #{tpu_custom_call.1} parent=31 // pred_fallthru
          _
      $region32: #{tpu_custom_call.1} parent=5 // pred_fallthru
        _
      %p198 = scmp.le.s32.totalorder 1, %s11
      %p199 = scmp.lt.s32.totalorder %s11, 3
      %p200 = pnand %p198, %p199
      %p201 = pneg %p200
      // Predicated region
      $region37: #{tpu_custom_call.1} parent=5 // pred_check
        _
      $region38: #{tpu_custom_call.1} parent=5 // pred_check_branch
        %203 = sbr.rel (%p200) target = $region40
      $region39: #{tpu_custom_call.1} parent=5 // pred_region
        %s204 = ssub.s32 %s11, 1
        %s205 = smul.u32 2, %s16
        %s206 = ssub.s32 3, %s205
        %p207 = scmp.lt.s32.totalorder %s206, 2
        %s208 = scalar_select %p207, %s206, 2
        %s209 = smul.u32 128, %s208
        %s210 = smul.u32 %s209, 7
        %p211 = scmp.lt.s32.totalorder %s205, 2
        %s212 = scalar_select %p211, %s205, 2
        %s213 = smul.addr %s212, 7
        %s214 = smul.addr %s213, 8
        %s215 = scalar_lea.vmem %s0, %s214
        %p216 = pneg %p37
        %p217 = pneg %p34
        %p218 = pneg %p58
        %p219 = pneg %p55
        %p220 = pneg %p79
        %p221 = pneg %p76
        %p222 = pneg %p100
        %p223 = pneg %p97
        %p224 = pneg %p121
        %p225 = pneg %p118
        %p226 = pneg %p147
        %p227 = pneg %p144
        %s228 = sand.u32 %s134, 1
        %s229 = sand.u32 %s134, 1
        %s230 = smul.addr %s229, 16
        %s231 = scalar_lea.vmem [#allocation2], %s230
        %s232 = smul.u32 2, %s16
        %s233 = ssub.s32 3, %s232
        %p234 = scmp.lt.s32.totalorder %s233, 2
        %s235 = scalar_select %p234, %s233, 2
        %s236 = smul.u32 128, %s235
        %s237 = smul.u32 %s236, 7
        %p238 = scmp.lt.s32.totalorder %s232, 2
        %s239 = scalar_select %p238, %s232, 2
        %s240 = smul.addr %s239, 7
        %s241 = smul.addr %s240, 8
        %s242 = scalar_lea.vmem %s0, %s241
        %s243 = smul.u32 2, %s16
        %s244 = ssub.s32 3, %s243
        %p245 = scmp.lt.s32.totalorder %s244, 2
        %s246 = scalar_select %p245, %s244, 2
        %s247 = smul.u32 128, %s246
        %s248 = smul.u32 %s247, 7
        %s249 = smul.u32 2, %s16
        %s250 = ssub.s32 3, %s249
        %p251 = scmp.lt.s32.totalorder %s250, 2
        %s252 = scalar_select %p251, %s250, 2
        %s253 = smul.u32 128, %s252
        %v254 = vld [vmem:[%s242] sm:$0xff]
        %v255 = vld [vmem:[%s242 + $0x8] sm:$0xff]
        %v256 = vld [vmem:[%s242 + $0x10] sm:$0xff]
        %v257 = vld [vmem:[%s242 + $0x18] sm:$0xff]
        %v258 = vld [vmem:[%s242 + $0x20] sm:$0xff]
        %v259 = vld [vmem:[%s242 + $0x28] sm:$0xff]
        %v260 = vld [vmem:[%s242 + $0x30] sm:$0xff]
        %v261 = vld [vmem:[%s242 + $0x38] sm:$0xff]
        %v262 = vld [vmem:[%s242 + $0x40] sm:$0xff]
        %v263 = vld [vmem:[%s242 + $0x48] sm:$0xff]
        %v264 = vld [vmem:[%s242 + $0x50] sm:$0xff]
        %v265 = vld [vmem:[%s242 + $0x58] sm:$0xff]
        %v266 = vld [vmem:[%s242 + $0x60] sm:$0xff]
        %v267 = vld [vmem:[%s242 + $0x68] sm:$0xff]
        %v268 = vld [vmem:[%s1] sm:$0xff]
        %v269 = vld [vmem:[%s1 + $0x8] sm:$0xff]
        %v270 = vld [vmem:[%s1 + $0x10] sm:$0xff]
        %v271 = vld [vmem:[%s1 + $0x18] sm:$0xff]
        %v272 = vld [vmem:[%s1 + $0x20] sm:$0xff]
        %v273 = vld [vmem:[%s1 + $0x28] sm:$0xff]
        %v274 = vld [vmem:[%s1 + $0x30] sm:$0xff]
        %v275 = vld [vmem:[%s1 + $0x38] sm:$0xff]
        %v276 = vld [vmem:[%s1 + $0x40] sm:$0xff]
        %v277 = vld [vmem:[%s1 + $0x48] sm:$0xff]
        %v278 = vld [vmem:[%s1 + $0x50] sm:$0xff]
        %v279 = vld [vmem:[%s1 + $0x58] sm:$0xff]
        %v280 = vld [vmem:[%s1 + $0x60] sm:$0xff]
        %v281 = vld [vmem:[%s1 + $0x68] sm:$0xff]
        %v282 = vld [vmem:[%s1 + $0x70] sm:$0xff]
        %v283 = vld [vmem:[%s1 + $0x78] sm:$0xff]
        %v284 = vld [vmem:[%s1 + $0x80] sm:$0xff]
        %v285 = vld [vmem:[%s1 + $0x88] sm:$0xff]
        %v286 = vld [vmem:[%s1 + $0x90] sm:$0xff]
        %v287 = vld [vmem:[%s1 + $0x98] sm:$0xff]
        %v288 = vld [vmem:[%s1 + $0xa0] sm:$0xff]
        %v289 = vld [vmem:[%s1 + $0xa8] sm:$0xff]
        %v290 = vld [vmem:[%s1 + $0xb0] sm:$0xff]
        %v291 = vld [vmem:[%s1 + $0xb8] sm:$0xff]
        %v292 = vld [vmem:[%s1 + $0xc0] sm:$0xff]
        %v293 = vld [vmem:[%s1 + $0xc8] sm:$0xff]
        %v294 = vld [vmem:[%s1 + $0xd0] sm:$0xff]
        %v295 = vld [vmem:[%s1 + $0xd8] sm:$0xff]
        %v296 = vld [vmem:[%s1 + $0xe0] sm:$0xff]
        %v297 = vld [vmem:[%s1 + $0xe8] sm:$0xff]
        %v298 = vld [vmem:[%s1 + $0xf0] sm:$0xff]
        %v299 = vld [vmem:[%s1 + $0xf8] sm:$0xff]
        %v300 = vld [vmem:[%s1 + $0x100] sm:$0xff]
        %v301 = vld [vmem:[%s1 + $0x108] sm:$0xff]
        %v302 = vld [vmem:[%s1 + $0x110] sm:$0xff]
        %v303 = vld [vmem:[%s1 + $0x118] sm:$0xff]
        %v304 = vld [vmem:[%s1 + $0x120] sm:$0xff]
        %v305 = vld [vmem:[%s1 + $0x128] sm:$0xff]
        %v306 = vld [vmem:[%s1 + $0x130] sm:$0xff]
        %v307 = vld [vmem:[%s1 + $0x138] sm:$0xff]
        %v308 = vld [vmem:[%s1 + $0x140] sm:$0xff]
        %v309 = vld [vmem:[%s1 + $0x148] sm:$0xff]
        %v310 = vld [vmem:[%s1 + $0x150] sm:$0xff]
        %v311 = vld [vmem:[%s1 + $0x158] sm:$0xff]
        %v312 = vld [vmem:[%s1 + $0x160] sm:$0xff]
        %v313 = vld [vmem:[%s1 + $0x168] sm:$0xff]
        %v314 = vld [vmem:[%s1 + $0x170] sm:$0xff]
        %v315 = vld [vmem:[%s1 + $0x178] sm:$0xff]
        %v316 = vld [vmem:[%s1 + $0x180] sm:$0xff]
        %v317 = vld [vmem:[%s1 + $0x188] sm:$0xff]
        %v318 = vld [vmem:[%s1 + $0x190] sm:$0xff]
        %v319 = vld [vmem:[%s1 + $0x198] sm:$0xff]
        %v320 = vld [vmem:[%s1 + $0x1a0] sm:$0xff]
        %v321 = vld [vmem:[%s1 + $0x1a8] sm:$0xff]
        %v322 = vld [vmem:[%s1 + $0x1b0] sm:$0xff]
        %v323 = vld [vmem:[%s1 + $0x1b8] sm:$0xff]
        %v324 = vld [vmem:[%s1 + $0x1c0] sm:$0xff]
        %v325 = vld [vmem:[%s1 + $0x1c8] sm:$0xff]
        %v326 = vld [vmem:[%s1 + $0x1d0] sm:$0xff]
        %v327 = vld [vmem:[%s1 + $0x1d8] sm:$0xff]
        %v328 = vld [vmem:[%s1 + $0x1e0] sm:$0xff]
        %v329 = vld [vmem:[%s1 + $0x1e8] sm:$0xff]
        %v330 = vld [vmem:[%s1 + $0x1f0] sm:$0xff]
        %v331 = vld [vmem:[%s1 + $0x1f8] sm:$0xff]
        %v332 = vld [vmem:[%s1 + $0x200] sm:$0xff]
        %v333 = vld [vmem:[%s1 + $0x208] sm:$0xff]
        %v334 = vld [vmem:[%s1 + $0x210] sm:$0xff]
        %v335 = vld [vmem:[%s1 + $0x218] sm:$0xff]
        %v336 = vld [vmem:[%s1 + $0x220] sm:$0xff]
        %v337 = vld [vmem:[%s1 + $0x228] sm:$0xff]
        %v338 = vld [vmem:[%s1 + $0x230] sm:$0xff]
        %v339 = vld [vmem:[%s1 + $0x238] sm:$0xff]
        %v340 = vld [vmem:[%s1 + $0x240] sm:$0xff]
        %v341 = vld [vmem:[%s1 + $0x248] sm:$0xff]
        %v342 = vld [vmem:[%s1 + $0x250] sm:$0xff]
        %v343 = vld [vmem:[%s1 + $0x258] sm:$0xff]
        %v344 = vld [vmem:[%s1 + $0x260] sm:$0xff]
        %v345 = vld [vmem:[%s1 + $0x268] sm:$0xff]
        %v346 = vld [vmem:[%s1 + $0x270] sm:$0xff]
        %v347 = vld [vmem:[%s1 + $0x278] sm:$0xff]
        %v348 = vld [vmem:[%s1 + $0x280] sm:$0xff]
        %v349 = vld [vmem:[%s1 + $0x288] sm:$0xff]
        %v350 = vld [vmem:[%s1 + $0x290] sm:$0xff]
        %v351 = vld [vmem:[%s1 + $0x298] sm:$0xff]
        %v352 = vld [vmem:[%s1 + $0x2a0] sm:$0xff]
        %v353 = vld [vmem:[%s1 + $0x2a8] sm:$0xff]
        %v354 = vld [vmem:[%s1 + $0x2b0] sm:$0xff]
        %v355 = vld [vmem:[%s1 + $0x2b8] sm:$0xff]
        %v356 = vld [vmem:[%s1 + $0x2c0] sm:$0xff]
        %v357 = vld [vmem:[%s1 + $0x2c8] sm:$0xff]
        %v358 = vld [vmem:[%s1 + $0x2d0] sm:$0xff]
        %v359 = vld [vmem:[%s1 + $0x2d8] sm:$0xff]
        %v360 = vld [vmem:[%s1 + $0x2e0] sm:$0xff]
        %v361 = vld [vmem:[%s1 + $0x2e8] sm:$0xff]
        %v362 = vld [vmem:[%s1 + $0x2f0] sm:$0xff]
        %v363 = vld [vmem:[%s1 + $0x2f8] sm:$0xff]
        %v364 = vld [vmem:[%s1 + $0x300] sm:$0xff]
        %v365 = vld [vmem:[%s1 + $0x308] sm:$0xff]
        %v366 = vld [vmem:[%s2] sm:$0x1]
        %v368 = vlaneseq
        %v369 = vshrl.u32 %v368, 7
        %v370 = vsub.s32 0, %v369
        %v371 = vrot.slane %v366, %v370
        %vm373 = vcmask 130048
        %v375 = vsel %vm373, %v260, 0
        %v378 = vsel %vm373, %v267, 0
        %380 = vmatprep.subr.mxu0 0.0
        %381 = vmatpush1.msra.mxu0 %v268
        %382 = vmatprep.subr.mxu0 0.0
        %383 = vmatpush1.msra.mxu0 %v269
        %384 = vmatprep.subr.mxu0 0.0
        %385 = vmatpush1.msra.mxu0 %v270
        %386 = vmatprep.subr.mxu0 0.0
        %387 = vmatpush1.msra.mxu0 %v271
        %388 = vmatprep.subr.mxu0 0.0
        %389 = vmatpush1.msra.mxu0 %v272
        %390 = vmatprep.subr.mxu0 0.0
        %391 = vmatpush1.msra.mxu0 %v273
        %392 = vmatprep.subr.mxu0 0.0
        %393 = vmatpush1.msra.mxu0 %v274
        %394 = vmatprep.subr.mxu0 0.0
        %395 = vmatpush1.msra.mxu0 %v275
        %396 = vmatprep.subr.mxu0 0.0
        %397 = vmatpush1.msra.mxu0 %v276
        %398 = vmatprep.subr.mxu0 0.0
        %399 = vmatpush1.msra.mxu0 %v277
        %400 = vmatprep.subr.mxu0 0.0
        %401 = vmatpush1.msra.mxu0 %v278
        %402 = vmatprep.subr.mxu0 0.0
        %403 = vmatpush1.msra.mxu0 %v279
        %404 = vmatprep.subr.mxu0 0.0
        %405 = vmatpush1.msra.mxu0 %v280
        %406 = vmatprep.subr.mxu0 0.0
        %407 = vmatpush1.msra.mxu0 %v281
        %408 = vmatprep.subr.mxu0 0.0
        %409 = vmatpush1.msra.mxu0 %v282
        %410 = vmatprep.subr.mxu0 0.0
        %411 = vmatpush1.msra.mxu0 %v283
        %412 = vmatprep.subr.mxu0 0.0
        %413 = vmatpush1.msra.mxu0 %v284
        %414 = vmatprep.subr.mxu0 0.0
        %415 = vmatpush1.msra.mxu0 %v285
        %416 = vmatprep.subr.mxu0 0.0
        %417 = vmatpush1.msra.mxu0 %v286
        %418 = vmatprep.subr.mxu0 0.0
        %419 = vmatpush1.msra.mxu0 %v287
        %420 = vmatprep.subr.mxu0 0.0
        %421 = vmatpush1.msra.mxu0 %v288
        %422 = vmatprep.subr.mxu0 0.0
        %423 = vmatpush1.msra.mxu0 %v289
        %424 = vmatprep.subr.mxu0 0.0
        %425 = vmatpush1.msra.mxu0 %v290
        %426 = vmatprep.subr.mxu0 0.0
        %427 = vmatpush1.msra.mxu0 %v291
        %428 = vmatprep.subr.mxu0 0.0
        %429 = vmatpush1.msra.mxu0 %v292
        %430 = vmatprep.subr.mxu0 0.0
        %431 = vmatpush1.msra.mxu0 %v293
        %432 = vmatprep.subr.mxu0 0.0
        %433 = vmatpush1.msra.mxu0 %v294
        %434 = vmatprep.subr.mxu0 0.0
        %435 = vmatpush1.msra.mxu0 %v295
        %436 = vmatprep.subr.mxu0 0.0
        %437 = vmatpush1.msra.mxu0 %v296
        %438 = vmatprep.subr.mxu0 0.0
        %439 = vmatpush1.msra.mxu0 %v297
        %440 = vmatprep.subr.mxu0 0.0
        %441 = vmatpush1.msra.mxu0 %v298
        %442 = vmatprep.subr.mxu0 0.0
        %443 = vmatpush1.msra.mxu0 %v299
        %444 = vmatprep.mubr.f32.mxu0 %v255
        %445 = vmatmul.mubr.f32.gmra.mrb[0].mxu0 %v254
        %v446 = vpop.f32.mrb[0].mxu0
        %v447 = vadd.f32 %v371, %v446
        %v448 = vpop.f32.mrb[0].mxu0
        %449 = vmatprep.mubr.f32.mxu0 %v262
        %450 = vmatmul.mubr.f32.gmra.mrb[0].mxu0 %v261
        %v451 = vpop.f32.mrb[0].mxu0
        %v452 = vadd.f32 %v371, %v451
        %v453 = vpop.f32.mrb[0].mxu0
        %454 = vdwg.mxu0
        %455 = vmatprep.subr.mxu0 0.0
        %456 = vmatpush1.msra.mxu0 %v300
        %457 = vmatprep.subr.mxu0 0.0
        %458 = vmatpush1.msra.mxu0 %v301
        %459 = vmatprep.subr.mxu0 0.0
        %460 = vmatpush1.msra.mxu0 %v302
        %461 = vmatprep.subr.mxu0 0.0
        %462 = vmatpush1.msra.mxu0 %v303
        %463 = vmatprep.subr.mxu0 0.0
        %464 = vmatpush1.msra.mxu0 %v304
        %465 = vmatprep.subr.mxu0 0.0
        %466 = vmatpush1.msra.mxu0 %v305
        %467 = vmatprep.subr.mxu0 0.0
        %468 = vmatpush1.msra.mxu0 %v306
        %469 = vmatprep.subr.mxu0 0.0
        %470 = vmatpush1.msra.mxu0 %v307
        %471 = vmatprep.subr.mxu0 0.0
        %472 = vmatpush1.msra.mxu0 %v308
        %473 = vmatprep.subr.mxu0 0.0
        %474 = vmatpush1.msra.mxu0 %v309
        %475 = vmatprep.subr.mxu0 0.0
        %476 = vmatpush1.msra.mxu0 %v310
        %477 = vmatprep.subr.mxu0 0.0
        %478 = vmatpush1.msra.mxu0 %v311
        %479 = vmatprep.subr.mxu0 0.0
        %480 = vmatpush1.msra.mxu0 %v312
        %481 = vmatprep.subr.mxu0 0.0
        %482 = vmatpush1.msra.mxu0 %v313
        %483 = vmatprep.subr.mxu0 0.0
        %484 = vmatpush1.msra.mxu0 %v314
        %485 = vmatprep.subr.mxu0 0.0
        %486 = vmatpush1.msra.mxu0 %v315
        %487 = vmatprep.subr.mxu0 0.0
        %488 = vmatpush1.msra.mxu0 %v316
        %489 = vmatprep.subr.mxu0 0.0
        %490 = vmatpush1.msra.mxu0 %v317
        %491 = vmatprep.subr.mxu0 0.0
        %492 = vmatpush1.msra.mxu0 %v318
        %493 = vmatprep.subr.mxu0 0.0
        %494 = vmatpush1.msra.mxu0 %v319
        %495 = vmatprep.subr.mxu0 0.0
        %496 = vmatpush1.msra.mxu0 %v320
        %497 = vmatprep.subr.mxu0 0.0
        %498 = vmatpush1.msra.mxu0 %v321
        %499 = vmatprep.subr.mxu0 0.0
        %500 = vmatpush1.msra.mxu0 %v322
        %501 = vmatprep.subr.mxu0 0.0
        %502 = vmatpush1.msra.mxu0 %v323
        %503 = vmatprep.subr.mxu0 0.0
        %504 = vmatpush1.msra.mxu0 %v324
        %505 = vmatprep.subr.mxu0 0.0
        %506 = vmatpush1.msra.mxu0 %v325
        %507 = vmatprep.subr.mxu0 0.0
        %508 = vmatpush1.msra.mxu0 %v326
        %509 = vmatprep.subr.mxu0 0.0
        %510 = vmatpush1.msra.mxu0 %v327
        %511 = vmatprep.subr.mxu0 0.0
        %512 = vmatpush1.msra.mxu0 %v328
        %513 = vmatprep.subr.mxu0 0.0
        %514 = vmatpush1.msra.mxu0 %v329
        %515 = vmatprep.subr.mxu0 0.0
        %516 = vmatpush1.msra.mxu0 %v330
        %517 = vmatprep.subr.mxu0 0.0
        %518 = vmatpush1.msra.mxu0 %v331
        %519 = vmatprep.mubr.f32.mxu0 %v257
        %520 = vmatmul.mubr.f32.gmra.mrb[0].mxu0 %v256
        %v521 = vpop.f32.mrb[0].mxu0
        %v522 = vadd.f32 %v447, %v521
        %v523 = vpop.f32.mrb[0].mxu0
        %524 = vmatprep.mubr.f32.mxu0 %v264
        %525 = vmatmul.mubr.f32.gmra.mrb[0].mxu0 %v263
        %v526 = vpop.f32.mrb[0].mxu0
        %v527 = vadd.f32 %v452, %v526
        %v528 = vpop.f32.mrb[0].mxu0
        %529 = vdwg.mxu0
        %530 = vmatprep.subr.mxu0 0.0
        %531 = vmatpush1.msra.mxu0 %v332
        %532 = vmatprep.subr.mxu0 0.0
        %533 = vmatpush1.msra.mxu0 %v333
        %534 = vmatprep.subr.mxu0 0.0
        %535 = vmatpush1.msra.mxu0 %v334
        %536 = vmatprep.subr.mxu0 0.0
        %537 = vmatpush1.msra.mxu0 %v335
        %538 = vmatprep.subr.mxu0 0.0
        %539 = vmatpush1.msra.mxu0 %v336
        %540 = vmatprep.subr.mxu0 0.0
        %541 = vmatpush1.msra.mxu0 %v337
        %542 = vmatprep.subr.mxu0 0.0
        %543 = vmatpush1.msra.mxu0 %v338
        %544 = vmatprep.subr.mxu0 0.0
        %545 = vmatpush1.msra.mxu0 %v339
        %546 = vmatprep.subr.mxu0 0.0
        %547 = vmatpush1.msra.mxu0 %v340
        %548 = vmatprep.subr.mxu0 0.0
        %549 = vmatpush1.msra.mxu0 %v341
        %550 = vmatprep.subr.mxu0 0.0
        %551 = vmatpush1.msra.mxu0 %v342
        %552 = vmatprep.subr.mxu0 0.0
        %553 = vmatpush1.msra.mxu0 %v343
        %554 = vmatprep.subr.mxu0 0.0
        %555 = vmatpush1.msra.mxu0 %v344
        %556 = vmatprep.subr.mxu0 0.0
        %557 = vmatpush1.msra.mxu0 %v345
        %558 = vmatprep.subr.mxu0 0.0
        %559 = vmatpush1.msra.mxu0 %v346
        %560 = vmatprep.subr.mxu0 0.0
        %561 = vmatpush1.msra.mxu0 %v347
        %562 = vmatprep.subr.mxu0 0.0
        %563 = vmatpush1.msra.mxu0 %v348
        %564 = vmatprep.subr.mxu0 0.0
        %565 = vmatpush1.msra.mxu0 %v349
        %566 = vmatprep.subr.mxu0 0.0
        %567 = vmatpush1.msra.mxu0 %v350
        %568 = vmatprep.subr.mxu0 0.0
        %569 = vmatpush1.msra.mxu0 %v351
        %570 = vmatprep.subr.mxu0 0.0
        %571 = vmatpush1.msra.mxu0 %v352
        %572 = vmatprep.subr.mxu0 0.0
        %573 = vmatpush1.msra.mxu0 %v353
        %574 = vmatprep.subr.mxu0 0.0
        %575 = vmatpush1.msra.mxu0 %v354
        %576 = vmatprep.subr.mxu0 0.0
        %577 = vmatpush1.msra.mxu0 %v355
        %578 = vmatprep.subr.mxu0 0.0
        %579 = vmatpush1.msra.mxu0 %v356
        %580 = vmatprep.subr.mxu0 0.0
        %581 = vmatpush1.msra.mxu0 %v357
        %582 = vmatprep.subr.mxu0 0.0
        %583 = vmatpush1.msra.mxu0 %v358
        %584 = vmatprep.subr.mxu0 0.0
        %585 = vmatpush1.msra.mxu0 %v359
        %586 = vmatprep.subr.mxu0 0.0
        %587 = vmatpush1.msra.mxu0 %v360
        %588 = vmatprep.subr.mxu0 0.0
        %589 = vmatpush1.msra.mxu0 %v361
        %590 = vmatprep.subr.mxu0 0.0
        %591 = vmatpush1.msra.mxu0 %v362
        %592 = vmatprep.subr.mxu0 0.0
        %593 = vmatpush1.msra.mxu0 %v363
        %594 = vmatprep.mubr.f32.mxu0 %v259
        %595 = vmatmul.mubr.f32.gmra.mrb[0].mxu0 %v258
        %v596 = vpop.f32.mrb[0].mxu0
        %v597 = vadd.f32 %v522, %v596
        %v598 = vpop.f32.mrb[0].mxu0
        %599 = vmatprep.mubr.f32.mxu0 %v266
        %600 = vmatmul.mubr.f32.gmra.mrb[0].mxu0 %v265
        %v601 = vpop.f32.mrb[0].mxu0
        %v602 = vadd.f32 %v527, %v601
        %v603 = vpop.f32.mrb[0].mxu0
        %604 = vdwg.mxu0
        %605 = vmatprep.subr.mxu0 0.0
        %606 = vmatpush1.msra.mxu0 %v364
        %607 = vmatprep.subr.mxu0 0.0
        %608 = vmatpush1.msra.mxu0 %v365
        %609 = vmatprep.subr.mxu0 0.0
        %610 = vmatpush1.msra.mxu0 0.0
        %611 = vmatprep.subr.mxu0 0.0
        %612 = vmatpush1.msra.mxu0 0.0
        %613 = vmatprep.subr.mxu0 0.0
        %614 = vmatpush1.msra.mxu0 0.0
        %615 = vmatprep.subr.mxu0 0.0
        %616 = vmatpush1.msra.mxu0 0.0
        %617 = vmatprep.subr.mxu0 0.0
        %618 = vmatpush1.msra.mxu0 0.0
        %619 = vmatprep.subr.mxu0 0.0
        %620 = vmatpush1.msra.mxu0 0.0
        %621 = vmatprep.subr.mxu0 0.0
        %622 = vmatpush1.msra.mxu0 0.0
        %623 = vmatprep.subr.mxu0 0.0
        %624 = vmatpush1.msra.mxu0 0.0
        %625 = vmatprep.subr.mxu0 0.0
        %626 = vmatpush1.msra.mxu0 0.0
        %627 = vmatprep.subr.mxu0 0.0
        %628 = vmatpush1.msra.mxu0 0.0
        %629 = vmatprep.subr.mxu0 0.0
        %630 = vmatpush1.msra.mxu0 0.0
        %631 = vmatprep.subr.mxu0 0.0
        %632 = vmatpush1.msra.mxu0 0.0
        %633 = vmatprep.subr.mxu0 0.0
        %634 = vmatpush1.msra.mxu0 0.0
        %635 = vmatprep.subr.mxu0 0.0
        %636 = vmatpush1.msra.mxu0 0.0
        %637 = vmatprep.subr.mxu0 0.0
        %638 = vmatpush1.msra.mxu0 0.0
        %639 = vmatprep.subr.mxu0 0.0
        %640 = vmatpush1.msra.mxu0 0.0
        %641 = vmatprep.subr.mxu0 0.0
        %642 = vmatpush1.msra.mxu0 0.0
        %643 = vmatprep.subr.mxu0 0.0
        %644 = vmatpush1.msra.mxu0 0.0
        %645 = vmatprep.subr.mxu0 0.0
        %646 = vmatpush1.msra.mxu0 0.0
        %647 = vmatprep.subr.mxu0 0.0
        %648 = vmatpush1.msra.mxu0 0.0
        %649 = vmatprep.subr.mxu0 0.0
        %650 = vmatpush1.msra.mxu0 0.0
        %651 = vmatprep.subr.mxu0 0.0
        %652 = vmatpush1.msra.mxu0 0.0
        %653 = vmatprep.subr.mxu0 0.0
        %654 = vmatpush1.msra.mxu0 0.0
        %655 = vmatprep.subr.mxu0 0.0
        %656 = vmatpush1.msra.mxu0 0.0
        %657 = vmatprep.subr.mxu0 0.0
        %658 = vmatpush1.msra.mxu0 0.0
        %659 = vmatprep.subr.mxu0 0.0
        %660 = vmatpush1.msra.mxu0 0.0
        %661 = vmatprep.subr.mxu0 0.0
        %662 = vmatpush1.msra.mxu0 0.0
        %663 = vmatprep.subr.mxu0 0.0
        %664 = vmatpush1.msra.mxu0 0.0
        %665 = vmatprep.subr.mxu0 0.0
        %666 = vmatpush1.msra.mxu0 0.0
        %667 = vmatprep.subr.mxu0 0.0
        %668 = vmatpush1.msra.mxu0 0.0
        %669 = vmatprep.mubr.f32.mxu0 0.0
        %670 = vmatmul.mubr.f32.gmra.mrb[0].mxu0 %v375
        %v671 = vpop.f32.mrb[0].mxu0
        %v672 = vadd.f32 %v597, %v671
        %v673 = vpop.f32.mrb[0].mxu0
        %674 = vmatprep.mubr.f32.mxu0 0.0
        %675 = vmatmul.mubr.f32.gmra.mrb[0].mxu0 %v378
        %v676 = vpop.f32.mrb[0].mxu0
        %v677 = vadd.f32 %v602, %v676
        %v678 = vpop.f32.mrb[0].mxu0
        %679 = vdwg.mxu0
        %v680 = vmax.f32 %v672, 0.0
        %v681 = vmax.f32 %v677, 0.0
        %v682 = vld [vmem:[%s3] sm:$0x1f]
        %v683 = vld [vmem:[%s4] sm:$0x1]
        %v685 = vlaneseq
        %v686 = vshrl.u32 %v685, 7
        %v687 = vsub.s32 0, %v686
        %v688 = vrot.slane %v683, %v687
        %vm690 = vcmask 39936
        %v692 = vsel %vm690, %v680, 0
        %v695 = vsel %vm690, %v681, 0
        %vm697 = vcmask 1044480
        %v699 = vsel %vm697, %v682, 0
        %701 = vmatprep.subr.mxu0 0.0
        %702 = vmatpush1.msra.mxu0 %v699
        %703 = vmatprep.subr.mxu0 0.0
        %704 = vmatpush1.msra.mxu0 0.0
        %705 = vmatprep.subr.mxu0 0.0
        %706 = vmatpush1.msra.mxu0 0.0
        %707 = vmatprep.subr.mxu0 0.0
        %708 = vmatpush1.msra.mxu0 0.0
        %709 = vmatprep.subr.mxu0 0.0
        %710 = vmatpush1.msra.mxu0 0.0
        %711 = vmatprep.subr.mxu0 0.0
        %712 = vmatpush1.msra.mxu0 0.0
        %713 = vmatprep.subr.mxu0 0.0
        %714 = vmatpush1.msra.mxu0 0.0
        %715 = vmatprep.subr.mxu0 0.0
        %716 = vmatpush1.msra.mxu0 0.0
        %717 = vmatprep.subr.mxu0 0.0
        %718 = vmatpush1.msra.mxu0 0.0
        %719 = vmatprep.subr.mxu0 0.0
        %720 = vmatpush1.msra.mxu0 0.0
        %721 = vmatprep.subr.mxu0 0.0
        %722 = vmatpush1.msra.mxu0 0.0
        %723 = vmatprep.subr.mxu0 0.0
        %724 = vmatpush1.msra.mxu0 0.0
        %725 = vmatprep.subr.mxu0 0.0
        %726 = vmatpush1.msra.mxu0 0.0
        %727 = vmatprep.subr.mxu0 0.0
        %728 = vmatpush1.msra.mxu0 0.0
        %729 = vmatprep.subr.mxu0 0.0
        %730 = vmatpush1.msra.mxu0 0.0
        %731 = vmatprep.subr.mxu0 0.0
        %732 = vmatpush1.msra.mxu0 0.0
        %733 = vmatprep.subr.mxu0 0.0
        %734 = vmatpush1.msra.mxu0 0.0
        %735 = vmatprep.subr.mxu0 0.0
        %736 = vmatpush1.msra.mxu0 0.0
        %737 = vmatprep.subr.mxu0 0.0
        %738 = vmatpush1.msra.mxu0 0.0
        %739 = vmatprep.subr.mxu0 0.0
        %740 = vmatpush1.msra.mxu0 0.0
        %741 = vmatprep.subr.mxu0 0.0
        %742 = vmatpush1.msra.mxu0 0.0
        %743 = vmatprep.subr.mxu0 0.0
        %744 = vmatpush1.msra.mxu0 0.0
        %745 = vmatprep.subr.mxu0 0.0
        %746 = vmatpush1.msra.mxu0 0.0
        %747 = vmatprep.subr.mxu0 0.0
        %748 = vmatpush1.msra.mxu0 0.0
        %749 = vmatprep.subr.mxu0 0.0
        %750 = vmatpush1.msra.mxu0 0.0
        %751 = vmatprep.subr.mxu0 0.0
        %752 = vmatpush1.msra.mxu0 0.0
        %753 = vmatprep.subr.mxu0 0.0
        %754 = vmatpush1.msra.mxu0 0.0
        %755 = vmatprep.subr.mxu0 0.0
        %756 = vmatpush1.msra.mxu0 0.0
        %757 = vmatprep.subr.mxu0 0.0
        %758 = vmatpush1.msra.mxu0 0.0
        %759 = vmatprep.subr.mxu0 0.0
        %760 = vmatpush1.msra.mxu0 0.0
        %761 = vmatprep.subr.mxu0 0.0
        %762 = vmatpush1.msra.mxu0 0.0
        %763 = vmatprep.subr.mxu0 0.0
        %764 = vmatpush1.msra.mxu0 0.0
        %765 = vmatprep.mubr.f32.mxu0 0.0
        %766 = vmatmul.mubr.f32.gmra.mrb[0].mxu0 %v692
        %v767 = vpop.f32.mrb[0].mxu0
        %v768 = vadd.f32 %v688, %v767
        %v769 = vpop.f32.mrb[0].mxu0
        %770 = vmatprep.mubr.f32.mxu0 0.0
        %771 = vmatmul.mubr.f32.gmra.mrb[0].mxu0 %v695
        %v772 = vpop.f32.mrb[0].mxu0
        %v773 = vadd.f32 %v688, %v772
        %v774 = vpop.f32.mrb[0].mxu0
        %775 = vdwg.mxu0
        %vm776 = vcmask 80896
        %v777 = vsel %vm776, %v768, -inf
        %778 = vmax.xlane.f32.xlu0 %v777
        %v779 = vpop.xlane.xlu0 %778
        %v780 = vsel %vm776, %v773, -inf
        %781 = vmax.xlane.f32.xlu0 %v780
        %v782 = vpop.xlane.xlu0 %781
        %v783 = vsub.f32 %v768, %v779
        %v784 = vsub.f32 %v773, %v782
        %v785 = vmul.f32 %v783, 1.442695
        %v786 = vpow.pop %v785
        %v787 = vmul.f32 %v784, 1.442695
        %v788 = vpow.pop %v787
        %v789 = vsel %vm776, %v786, 0.0
        %790 = vadd.xlane.f32.xlu0 %v789
        %v791 = vpop.xlane.xlu0 %790
        %v792 = vsel %vm776, %v788, 0.0
        %793 = vadd.xlane.f32.xlu0 %v792
        %v794 = vpop.xlane.xlu0 %793
        %v795 = vlog2.pop %v791
        %v796 = vmul.f32 %v795, 0.6931472
        %v797 = vlog2.pop %v794
        %v798 = vmul.f32 %v797, 0.6931472
        %v799 = vsub.f32 %v783, %v796
        %v800 = vsub.f32 %v784, %v798
        %801 = vst.msk [vmem:[%s231] sm:$0xff] %vm776, %v799
        %802 = vst.msk [vmem:[%s231 + $0x8] sm:$0xff] %vm776, %v800
        %s803 = sand.u32 %s134, 1
        %s804 = sand.u32 %s134, 1
        %s805 = smul.addr %s804, 16
        %s806 = scalar_lea.vmem [#allocation2], %s805
        // Predicated region
        $region41: #{tpu_custom_call.1} parent=39 // pred_check
          %p807 = pneg %p144
        $region42: #{tpu_custom_call.1} parent=39 // pred_check_branch
          %809 = sbr.rel (%p807) target = $region44
        $region43: #{tpu_custom_call.1} parent=39 // pred_region
          %s810 = smul.u32 2, %s16
          %s811 = ssub.s32 3, %s810
          %p812 = scmp.lt.s32.totalorder %s811, 2
          %s813 = scalar_select %p812, %s811, 2
          %s814 = smul.u32 128, %s813
          %p815 = scmp.ne.s32.totalorder 0, %s814
          %s816 = smul.addr %s810, 8
          %s817 = scalar_lea.vmem %s5, %s816
          // Predicated region
          $region45: #{tpu_custom_call.1} parent=43 // pred_check
            %p818 = pneg %p815
          $region46: #{tpu_custom_call.1} parent=43 // pred_check_branch
            %820 = sbr.rel (%p818) target = $region48
          $region47: #{tpu_custom_call.1} parent=43 // pred_region
            // Predicated region
            $region49: #{tpu_custom_call.1} parent=47 // pred_check
              _
            $region50: #{tpu_custom_call.1} parent=47 // pred_check_branch
              %822 = sbr.rel (0) target = $region52
            $region51: #{tpu_custom_call.1} parent=47 // pred_region
              // Predicated region
              $region71: #{tpu_custom_call.1} parent=51 // pred_check
                _
              $region72: #{tpu_custom_call.1} parent=51 // pred_check_branch
                %873 = sbr.rel (0) target = $region74
              $region73: #{tpu_custom_call.1} parent=51 // pred_region
                %s874 = sshrl.u32 %s813, 1
                // While loop
                $region75: #{tpu_custom_call.1} parent=73 // loop_pre_header
                  _
                $region76: #{tpu_custom_call.1} parent=73 // loop_header
                  %s876 = sphi 0, %s878
                  %p877 = scmp.ge.s32.totalorder %s876, %s874
                  %s881 = sphi 0, %s890
                  %s882 = sphi %s806, %s893
                  %s883 = sphi %s817, %s894
                $region77: #{tpu_custom_call.1} parent=73 // loop_header_branch
                  %880 = sbr.rel (%p877) target = $region81
                $region78: #{tpu_custom_call.1} parent=73 // loop_body
                  %v884 = vld [vmem:[%s882] sm:$0xff]
                  %885 = vst [vmem:[%s883] sm:$0xff] %v884
                  %v886 = vld [vmem:[%s882 + $0x8] sm:$0xff]
                  %887 = vst [vmem:[%s883 + $0x8] sm:$0xff] %v886
                  %s888 = sadd.s32 1, %s881
                  %p889 = scmp.ge.s32.totalorder %s888, %s874
                  %s890 = scalar_select %p889, 0, %s888
                  %s891 = smul.u32 %s890, 16
                  %s892 = smul.u32 %s890, 16
                  %s893 = scalar_lea.vmem %s806, %s891 [#allocation2]
                  %s894 = scalar_lea.vmem %s817, %s892
                $region79: #{tpu_custom_call.1} parent=73 // loop_footer
                  %s878 = sadd.s32 %s876, 1
                $region80: #{tpu_custom_call.1} parent=73 // loop_footer_branch
                  %875 = sbr.rel target = $region76
                $region81: #{tpu_custom_call.1} parent=73 // loop_exit
                  _
                %s895 = sshrl.u32 %s813, 1
                %s896 = sand.u32 %s813, 1
                %s897 = smul.u32 %s895, 2
                %s898 = smul.u32 8, %s897
                %s899 = scalar_lea.vmem %s806, %s898 [#allocation2]
                %s900 = smul.u32 8, %s897
                %s901 = scalar_lea.vmem %s817, %s900
                // While loop
                $region82: #{tpu_custom_call.1} parent=73 // loop_pre_header
                  _
                $region83: #{tpu_custom_call.1} parent=73 // loop_header
                  %s903 = sphi 0, %s905
                  %p904 = scmp.ge.s32.totalorder %s903, %s896
                  %s908 = sphi 0, %s915
                  %s909 = sphi %s899, %s918
                  %s910 = sphi %s901, %s919
                $region84: #{tpu_custom_call.1} parent=73 // loop_header_branch
                  %907 = sbr.rel (%p904) target = $region88
                $region85: #{tpu_custom_call.1} parent=73 // loop_body
                  %v911 = vld [vmem:[%s909] sm:$0xff]
                  %912 = vst [vmem:[%s910] sm:$0xff] %v911
                  %s913 = sadd.s32 1, %s908
                  %p914 = scmp.ge.s32.totalorder %s913, %s896
                  %s915 = scalar_select %p914, 0, %s913
                  %s916 = smul.u32 %s915, 8
                  %s917 = smul.u32 %s915, 8
                  %s918 = scalar_lea.vmem %s899, %s916 [#allocation2]
                  %s919 = scalar_lea.vmem %s901, %s917
                $region86: #{tpu_custom_call.1} parent=73 // loop_footer
                  %s905 = sadd.s32 %s903, 1
                $region87: #{tpu_custom_call.1} parent=73 // loop_footer_branch
                  %902 = sbr.rel target = $region83
                $region88: #{tpu_custom_call.1} parent=73 // loop_exit
                  _
              $region74: #{tpu_custom_call.1} parent=51 // pred_fallthru
                _
              // Predicated region
              $region89: #{tpu_custom_call.1} parent=51 // pred_check
                _
              $region90: #{tpu_custom_call.1} parent=51 // pred_check_branch
                %921 = sbr.rel target = $region92
              $region91: #{tpu_custom_call.1} parent=51 // pred_region
                _
              $region92: #{tpu_custom_call.1} parent=51 // pred_fallthru
                _
            $region52: #{tpu_custom_call.1} parent=47 // pred_fallthru
              _
            // Predicated region
            $region53: #{tpu_custom_call.1} parent=47 // pred_check
              _
            $region54: #{tpu_custom_call.1} parent=47 // pred_check_branch
              %824 = sbr.rel target = $region56
            $region55: #{tpu_custom_call.1} parent=47 // pred_region
              %s826 = sshrl.u32 %s813, 1
              // While loop
              $region57: #{tpu_custom_call.1} parent=55 // loop_pre_header
                _
              $region58: #{tpu_custom_call.1} parent=55 // loop_header
                %s828 = sphi 0, %s830
                %p829 = scmp.ge.s32.totalorder %s828, %s826
                %s833 = sphi 0, %s842
                %s834 = sphi %s806, %s845
                %s835 = sphi %s817, %s846
              $region59: #{tpu_custom_call.1} parent=55 // loop_header_branch
                %832 = sbr.rel (%p829) target = $region63
              $region60: #{tpu_custom_call.1} parent=55 // loop_body
                %v836 = vld [vmem:[%s834] sm:$0xff]
                %837 = vst [vmem:[%s835] sm:$0xff] %v836
                %v838 = vld [vmem:[%s834 + $0x8] sm:$0xff]
                %839 = vst [vmem:[%s835 + $0x8] sm:$0xff] %v838
                %s840 = sadd.s32 1, %s833
                %p841 = scmp.ge.s32.totalorder %s840, %s826
                %s842 = scalar_select %p841, 0, %s840
                %s843 = smul.u32 %s842, 16
                %s844 = smul.u32 %s842, 16
                %s845 = scalar_lea.vmem %s806, %s843 [#allocation2]
                %s846 = scalar_lea.vmem %s817, %s844
              $region61: #{tpu_custom_call.1} parent=55 // loop_footer
                %s830 = sadd.s32 %s828, 1
              $region62: #{tpu_custom_call.1} parent=55 // loop_footer_branch
                %827 = sbr.rel target = $region58
              $region63: #{tpu_custom_call.1} parent=55 // loop_exit
                _
              %s847 = sshrl.u32 %s813, 1
              %s848 = sand.u32 %s813, 1
              %s849 = smul.u32 %s847, 2
              %s850 = smul.u32 8, %s849
              %s851 = scalar_lea.vmem %s806, %s850 [#allocation2]
              %s852 = smul.u32 8, %s849
              %s853 = scalar_lea.vmem %s817, %s852
              // While loop
              $region64: #{tpu_custom_call.1} parent=55 // loop_pre_header
                _
              $region65: #{tpu_custom_call.1} parent=55 // loop_header
                %s855 = sphi 0, %s857
                %p856 = scmp.ge.s32.totalorder %s855, %s848
                %s860 = sphi 0, %s867
                %s861 = sphi %s851, %s870
                %s862 = sphi %s853, %s871
              $region66: #{tpu_custom_call.1} parent=55 // loop_header_branch
                %859 = sbr.rel (%p856) target = $region70
              $region67: #{tpu_custom_call.1} parent=55 // loop_body
                %v863 = vld [vmem:[%s861] sm:$0xff]
                %864 = vst [vmem:[%s862] sm:$0xff] %v863
                %s865 = sadd.s32 1, %s860
                %p866 = scmp.ge.s32.totalorder %s865, %s848
                %s867 = scalar_select %p866, 0, %s865
                %s868 = smul.u32 %s867, 8
                %s869 = smul.u32 %s867, 8
                %s870 = scalar_lea.vmem %s851, %s868 [#allocation2]
                %s871 = scalar_lea.vmem %s853, %s869
              $region68: #{tpu_custom_call.1} parent=55 // loop_footer
                %s857 = sadd.s32 %s855, 1
              $region69: #{tpu_custom_call.1} parent=55 // loop_footer_branch
                %854 = sbr.rel target = $region65
              $region70: #{tpu_custom_call.1} parent=55 // loop_exit
                _
            $region56: #{tpu_custom_call.1} parent=47 // pred_fallthru
              _
          $region48: #{tpu_custom_call.1} parent=43 // pred_fallthru
            _
          %922 = vnop
        $region44: #{tpu_custom_call.1} parent=39 // pred_fallthru
          _
      $region40: #{tpu_custom_call.1} parent=5 // pred_fallthru
        _
      %p923 = scmp.le.s32.totalorder 2, %s11
      // Predicated region
      $region93: #{tpu_custom_call.1} parent=5 // pred_check
        %p924 = pneg %p923
      $region94: #{tpu_custom_call.1} parent=5 // pred_check_branch
        %926 = sbr.rel (%p924) target = $region96
      $region95: #{tpu_custom_call.1} parent=5 // pred_region
        %s927 = ssub.s32 %s11, 2
        // Predicated region
        $region97: #{tpu_custom_call.1} parent=95 // pred_check
          %p928 = pneg %p150
        $region98: #{tpu_custom_call.1} parent=95 // pred_check_branch
          %930 = sbr.rel (%p928) target = $region100
        $region99: #{tpu_custom_call.1} parent=95 // pred_region
          %s931 = sand.u32 %s135, 1
          %s932 = sand.u32 %s135, 1
          %s933 = smul.addr %s932, 16
          %s934 = scalar_lea.vmem [#allocation2], %s933
        $region100: #{tpu_custom_call.1} parent=95 // pred_fallthru
          _
      $region96: #{tpu_custom_call.1} parent=5 // pred_fallthru
        _
    $region6: #{tpu_custom_call.1} parent=1 // loop_footer
      %s15 = sadd.s32 1, %s11
    $region7: #{tpu_custom_call.1} parent=1 // loop_footer_branch
      %10 = sbr.rel target = $region3
    $region8: #{tpu_custom_call.1} parent=1 // loop_exit
      _

</llo_original>
